<compile_context>
chip_gen: v5e
topology: v5e:2x2
jax: 0.10.0
libtpu: 0.0.40
codegen_flags: <defaults>
</compile_context>

<pallas_src>
import functools

import jax
import jax.numpy as jnp
from jax.experimental import pallas as pl
from jax.experimental.pallas import tpu as pltpu


def li2_kernel(x_ref, s0_ref, s1_ref, p_ref, out_ref, s0_new_ref, s1_new_ref):
    # Tensors: (tile_rows, tile_cols); params: (tile_rows, 5) f32.
    x = x_ref[...].astype(jnp.float32)
    s0 = s0_ref[...].astype(jnp.float32)
    s1 = s1_ref[...].astype(jnp.float32)

    p = p_ref[...]                 # (tile_rows, 5) f32
    tau0 = p[:, 0:1]               # (tile_rows, 1) -> broadcasts along lanes
    tau1 = p[:, 1:2]
    bias = p[:, 2:3]
    gate0 = p[:, 3:4]
    gate1 = p[:, 4:5]

    # state_0_new = state_0 + tau0 * (x - state_0)
    s0_new = s0 + tau0 * (x - s0)
    # state_1_new = state_1 + tau1 * (state_0_old - state_1)
    s1_new = s1 + tau1 * (s0 - s1)

    out = s0_new * gate0 + s1_new * gate1 + bias
    # Hardtanh(min=0, max=1) == clip to [0, 1]
    out_ref[...] = jnp.clip(out, 0.0, 1.0).astype(out_ref.dtype)
    s0_new_ref[...] = s0_new.astype(s0_new_ref.dtype)
    s1_new_ref[...] = s1_new.astype(s1_new_ref.dtype)


# A (rows, 5) f32 param block is lane-padded to 128 lanes in VMEM.
_PARAM_LANE_PAD_BYTES = 128 * 4


def _choose_tiles(n_rows, n_cols, itemsize):
    """Pick a (sublane, lane) tile: lane axis grown first (up to 2048, multiple
    of 128 or full extent), sublane axis sized to ~2 MiB per tensor stream and
    rounded to the dtype's sublane-packing multiple. The lane-padded param
    block is capped at ~1 MiB per buffer."""
    sub = max(8, 32 // itemsize)                       # 8 f32, 16 bf16, 32 int8/fp8
    if n_cols >= 128:
        tile_cols = min(2048, (n_cols // 128) * 128)
    else:
        tile_cols = n_cols                             # full extent (< 128 lanes)
    target_bytes = 2 << 20                             # ~2 MiB / tensor / tile
    rows = target_bytes // max(1, tile_cols * itemsize)
    rows = max(sub, (rows // sub) * sub)
    rows = min(rows, (1 << 20) // _PARAM_LANE_PAD_BYTES)   # param-block cap
    tile_rows = n_rows if rows >= n_rows else rows
    return tile_rows, tile_cols


def _vmem_limit_bytes(tile_rows, tile_cols, itemsize):
    """Right-size the scoped VMEM limit: 6 tensor streams x 2 buffers x tile
    + 2 lane-padded param buffers, plus headroom; clamped for v7x (64 MiB)."""
    tile_bytes = tile_rows * tile_cols * itemsize
    param_bytes = tile_rows * _PARAM_LANE_PAD_BYTES
    need = 6 * 2 * tile_bytes + 2 * param_bytes
    return int(min(max(need * 5 // 4 + (8 << 20), 32 << 20), 56 << 20))


def li2_reference(x, state_0, state_1, tau0, tau1, bias, gate0, gate1):
    C = x.shape[1]
    v = lambda p: p.reshape(1, C, 1, 1)
    s0_new = state_0 + v(tau0) * (x - state_0)
    s1_new = state_1 + v(tau1) * (state_0 - state_1)
    out = s0_new * v(gate0) + s1_new * v(gate1) + v(bias)
    return jnp.clip(out, 0.0, 1.0), s0_new, s1_new


def li2_forward(x, state_0, state_1, tau0, tau1, bias, gate0, gate1,
                *, force_pallas=False):
    N, C, H, W = x.shape
    NC, HW = N * C, H * W
    dtype = x.dtype
    itemsize = jnp.dtype(dtype).itemsize

    # Tiny-problem guard: pallas_call launch overhead + a 1x1 grid is a loss
    # below ~1 MiB of data; let XLA's fused elementwise op handle it.
    if (not force_pallas) and (NC * HW * itemsize < (1 << 20)):
        return li2_reference(x, state_0, state_1, tau0, tau1, bias, gate0, gate1)

    # Lane-dense 2-D layout: rows = N*C, cols = H*W.
    x2 = x.reshape(NC, HW)
    s0_2 = state_0.reshape(NC, HW)
    s1_2 = state_1.reshape(NC, HW)

    # Pack the five per-channel params into one (N*C, 5) f32 array (negligible
    # HBM traffic vs. the 6 tensor streams; fused under jit).
    params = jnp.stack([tau0, tau1, bias, gate0, gate1], axis=-1)       # (C, 5)
    params = params.astype(jnp.float32)
    params = jnp.broadcast_to(params[None], (N, C, 5)).reshape(NC, 5)    # (NC, 5)

    tile_rows, tile_cols = _choose_tiles(NC, HW, itemsize)
    grid = (pl.cdiv(NC, tile_rows), pl.cdiv(HW, tile_cols))

    tensor_spec = pl.BlockSpec((tile_rows, tile_cols), lambda i, j: (i, j))
    param_spec = pl.BlockSpec((tile_rows, 5), lambda i, j: (i, 0))

    out_shape = tuple(jax.ShapeDtypeStruct((NC, HW), dtype) for _ in range(3))

    out2, s0n2, s1n2 = pl.pallas_call(
        li2_kernel,
        out_shape=out_shape,
        grid_spec=pltpu.PrefetchScalarGridSpec(
            num_scalar_prefetch=0,
            grid=grid,
            in_specs=[tensor_spec, tensor_spec, tensor_spec, param_spec],
            out_specs=[tensor_spec, tensor_spec, tensor_spec],
        ),
        # state_0 -> state_0_new, state_1 -> state_1_new (in-place friendly).
        input_output_aliases={1: 1, 2: 2},
        compiler_params=pltpu.CompilerParams(
            dimension_semantics=("parallel", "parallel"),
            vmem_limit_bytes=_vmem_limit_bytes(tile_rows, tile_cols, itemsize),
        ),
    )(x2, s0_2, s1_2, params)

    shape = (N, C, H, W)
    return out2.reshape(shape), s0n2.reshape(shape), s1n2.reshape(shape)


if __name__ == "__main__":
    key = jax.random.PRNGKey(0)
    N, C, H, W = 2, 4, 16, 16
    dtype = jnp.float32

    keys = jax.random.split(key, 8)
    x = jax.random.normal(keys[0], (N, C, H, W), dtype)
    state_0 = jax.random.normal(keys[1], (N, C, H, W), dtype)
    state_1 = jax.random.normal(keys[2], (N, C, H, W), dtype)

    # Parameter init mirroring the PyTorch module:
    # tau0/tau1/bias ~ U[0,1), gate0/gate1 ~ N(0,1)
    tau0 = jax.random.uniform(keys[3], (C,), dtype)
    tau1 = jax.random.uniform(keys[4], (C,), dtype)
    bias = jax.random.uniform(keys[5], (C,), dtype)
    gate0 = jax.random.normal(keys[6], (C,), dtype)
    gate1 = jax.random.normal(keys[7], (C,), dtype)

    # Force the Pallas path so the kernel is exercised even at demo size.
    fwd = jax.jit(functools.partial(li2_forward, force_pallas=True))
    out, s0_new, s1_new = fwd(x, state_0, state_1,
                              tau0, tau1, bias, gate0, gate1)
    jax.block_until_ready((out, s0_new, s1_new))

    # Sanity check against pure-JAX reference.
    out_r, s0_r, s1_r = li2_reference(x, state_0, state_1,
                                      tau0, tau1, bias, gate0, gate1)
    assert jnp.allclose(out, out_r, atol=1e-6), "out mismatch"
    assert jnp.allclose(s0_new, s0_r, atol=1e-6), "state_0_new mismatch"
    assert jnp.allclose(s1_new, s1_r, atol=1e-6), "state_1_new mismatch"

    print("KERNEL_OK")
</pallas_src>

<mosaic_0001>
module attributes {stable_mosaic.version = 11 : i64} {
  func.func @li2_kernel(%arg0: i32, %arg1: i32, %arg2: memref<8x256xf32, #tpu.memory_space<vmem>>, %arg3: memref<8x256xf32, #tpu.memory_space<vmem>>, %arg4: memref<8x256xf32, #tpu.memory_space<vmem>>, %arg5: memref<8x5xf32, #tpu.memory_space<vmem>>, %arg6: memref<8x256xf32, #tpu.memory_space<vmem>>, %arg7: memref<8x256xf32, #tpu.memory_space<vmem>>, %arg8: memref<8x256xf32, #tpu.memory_space<vmem>>) attributes {dimension_semantics = [#tpu.dimension_semantics<parallel>, #tpu.dimension_semantics<parallel>], iteration_bounds = array<i64: 1, 1>, scalar_prefetch = 0 : i64, scratch_operands = 0 : i64, tpu.core_type = #tpu.core_type<tc>, window_params = [{transform_indices = @transform_0, window_bounds = array<i64: 8, 256>}, {transform_indices = @transform_1, window_bounds = array<i64: 8, 256>}, {transform_indices = @transform_2, window_bounds = array<i64: 8, 256>}, {transform_indices = @transform_3, window_bounds = array<i64: 8, 5>}, {transform_indices = @transform_4, window_bounds = array<i64: 8, 256>}, {transform_indices = @transform_5, window_bounds = array<i64: 8, 256>}, {transform_indices = @transform_6, window_bounds = array<i64: 8, 256>}]} {
    %c0 = arith.constant 0 : index
    %c0_0 = arith.constant 0 : index
    %0 = vector.load %arg2[%c0, %c0_0] : memref<8x256xf32, #tpu.memory_space<vmem>>, vector<8x256xf32>
    %c0_1 = arith.constant 0 : index
    %c0_2 = arith.constant 0 : index
    %1 = vector.load %arg3[%c0_1, %c0_2] : memref<8x256xf32, #tpu.memory_space<vmem>>, vector<8x256xf32>
    %c0_3 = arith.constant 0 : index
    %c0_4 = arith.constant 0 : index
    %2 = vector.load %arg4[%c0_3, %c0_4] : memref<8x256xf32, #tpu.memory_space<vmem>>, vector<8x256xf32>
    %c0_5 = arith.constant 0 : index
    %c0_6 = arith.constant 0 : index
    %3 = vector.load %arg5[%c0_5, %c0_6] : memref<8x5xf32, #tpu.memory_space<vmem>>, vector<8x5xf32>
    %4 = vector.extract_strided_slice %3 {offsets = [0, 0], sizes = [8, 1], strides = [1, 1]} : vector<8x5xf32> to vector<8x1xf32>
    %5 = vector.extract_strided_slice %3 {offsets = [0, 1], sizes = [8, 1], strides = [1, 1]} : vector<8x5xf32> to vector<8x1xf32>
    %6 = vector.extract_strided_slice %3 {offsets = [0, 2], sizes = [8, 1], strides = [1, 1]} : vector<8x5xf32> to vector<8x1xf32>
    %7 = vector.extract_strided_slice %3 {offsets = [0, 3], sizes = [8, 1], strides = [1, 1]} : vector<8x5xf32> to vector<8x1xf32>
    %8 = vector.extract_strided_slice %3 {offsets = [0, 4], sizes = [8, 1], strides = [1, 1]} : vector<8x5xf32> to vector<8x1xf32>
    %9 = arith.subf %0, %1 : vector<8x256xf32>
    %10 = vector.broadcast %4 : vector<8x1xf32> to vector<8x256xf32>
    %11 = arith.mulf %10, %9 : vector<8x256xf32>
    %12 = arith.addf %1, %11 : vector<8x256xf32>
    %13 = arith.subf %1, %2 : vector<8x256xf32>
    %14 = vector.broadcast %5 : vector<8x1xf32> to vector<8x256xf32>
    %15 = arith.mulf %14, %13 : vector<8x256xf32>
    %16 = arith.addf %2, %15 : vector<8x256xf32>
    %17 = vector.broadcast %7 : vector<8x1xf32> to vector<8x256xf32>
    %18 = arith.mulf %12, %17 : vector<8x256xf32>
    %19 = vector.broadcast %8 : vector<8x1xf32> to vector<8x256xf32>
    %20 = arith.mulf %16, %19 : vector<8x256xf32>
    %21 = arith.addf %18, %20 : vector<8x256xf32>
    %22 = vector.broadcast %6 : vector<8x1xf32> to vector<8x256xf32>
    %23 = arith.addf %21, %22 : vector<8x256xf32>
    %cst = arith.constant 0.000000e+00 : f32
    %cst_7 = arith.constant 1.000000e+00 : f32
    %24 = vector.broadcast %cst : f32 to vector<8x256xf32>
    %25 = arith.maximumf %24, %23 : vector<8x256xf32>
    %26 = vector.broadcast %cst_7 : f32 to vector<8x256xf32>
    %27 = arith.minimumf %26, %25 : vector<8x256xf32>
    %c0_8 = arith.constant 0 : index
    %c0_9 = arith.constant 0 : index
    %28 = vector.load %arg6[%c0_8, %c0_9] : memref<8x256xf32, #tpu.memory_space<vmem>>, vector<8x256xf32>
    tpu.vector_store %arg6[%c0_8, %c0_9], %27 {strides = array<i32>} : memref<8x256xf32, #tpu.memory_space<vmem>>, vector<8x256xf32>,
    %c0_10 = arith.constant 0 : index
    %c0_11 = arith.constant 0 : index
    %29 = vector.load %arg7[%c0_10, %c0_11] : memref<8x256xf32, #tpu.memory_space<vmem>>, vector<8x256xf32>
    tpu.vector_store %arg7[%c0_10, %c0_11], %12 {strides = array<i32>} : memref<8x256xf32, #tpu.memory_space<vmem>>, vector<8x256xf32>,
    %c0_12 = arith.constant 0 : index
    %c0_13 = arith.constant 0 : index
    %30 = vector.load %arg8[%c0_12, %c0_13] : memref<8x256xf32, #tpu.memory_space<vmem>>, vector<8x256xf32>
    tpu.vector_store %arg8[%c0_12, %c0_13], %16 {strides = array<i32>} : memref<8x256xf32, #tpu.memory_space<vmem>>, vector<8x256xf32>,
    return
  }
  func.func @transform_0(%arg0: i32, %arg1: i32) -> (i32, i32) {
    %c0_i32 = arith.constant 0 : i32
    return %arg0, %arg1 : i32, i32
  }
  func.func @transform_1(%arg0: i32, %arg1: i32) -> (i32, i32) {
    %c0_i32 = arith.constant 0 : i32
    return %arg0, %arg1 : i32, i32
  }
  func.func @transform_2(%arg0: i32, %arg1: i32) -> (i32, i32) {
    %c0_i32 = arith.constant 0 : i32
    return %arg0, %arg1 : i32, i32
  }
  func.func @transform_3(%arg0: i32, %arg1: i32) -> (i32, i32) {
    %c0_i32 = arith.constant 0 : i32
    %c0_i32_0 = arith.constant 0 : i32
    return %arg0, %c0_i32 : i32, i32
  }
  func.func @transform_4(%arg0: i32, %arg1: i32) -> (i32, i32) {
    %c0_i32 = arith.constant 0 : i32
    return %arg0, %arg1 : i32, i32
  }
  func.func @transform_5(%arg0: i32, %arg1: i32) -> (i32, i32) {
    %c0_i32 = arith.constant 0 : i32
    return %arg0, %arg1 : i32, i32
  }
  func.func @transform_6(%arg0: i32, %arg1: i32) -> (i32, i32) {
    %c0_i32 = arith.constant 0 : i32
    return %arg0, %arg1 : i32, i32
  }
}

</mosaic_0001>

<llo_original>
// kernel: li2_forward.1
$region0: #{li2_forward.1}
  #allocation0 [shape = 'u32[]', space=smem, size = 0x4, offset = 0x4, fixed_abs, tag = 'smem constant byte address 0x4 - core index']
  #allocation1 [shape = 'u32[72,128]{1,0:T(1,128)}', space=vmem, size = 0x9000, scoped, tag = 'internal scratch']
  %s0 = inlined_call_operand.vmem [shape: f32[8,256], index: 0, kind: input, shape index: {}]
  %s1 = inlined_call_operand.vmem [shape: f32[8,256], index: 1, kind: input, shape index: {}, may-alias: {1,5}]
  %s2 = inlined_call_operand.vmem [shape: f32[8,256], index: 2, kind: input, shape index: {}, may-alias: {2,6}]
  %s3 = inlined_call_operand.vmem [shape: f32[8,5], index: 3, kind: input, shape index: {}]
  %s4 = inlined_call_operand.vmem [shape: f32[8,256], index: 4, kind: output, shape index: {0}]
  %s5 = inlined_call_operand.vmem [shape: f32[8,256], index: 5, kind: output, shape index: {1}, may-alias: {1,5}]
  %s6 = inlined_call_operand.vmem [shape: f32[8,256], index: 6, kind: output, shape index: {2}, may-alias: {2,6}]
  %7 = xla_tuple %s4, %s5, %s6
  %s8 = sld [smem:[#allocation0]]
  $region42: #{li2_forward.1} parent=0
    _
  %s10 = ssub.s32 1, %s8
  %s11 = scalar_select 0, %s10, %s8
  // Predicated region
  $region2: #{li2_forward.1} parent=0 // pred_check
    _
  $region3: #{li2_forward.1} parent=0 // pred_check_branch
    %13 = sbr.rel (0) target = $region5
  $region4: #{li2_forward.1} parent=0 // pred_region
    _
  $region5: #{li2_forward.1} parent=0 // pred_fallthru
    _
  // Predicated region
  $region6: #{li2_forward.1} parent=0 // pred_check
    _
  $region7: #{li2_forward.1} parent=0 // pred_check_branch
    %15 = sbr.rel (0) target = $region9
  $region8: #{li2_forward.1} parent=0 // pred_region
    _
  $region9: #{li2_forward.1} parent=0 // pred_fallthru
    _
  // Predicated region
  $region10: #{li2_forward.1} parent=0 // pred_check
    _
  $region11: #{li2_forward.1} parent=0 // pred_check_branch
    %17 = sbr.rel (0) target = $region13
  $region12: #{li2_forward.1} parent=0 // pred_region
    _
  $region13: #{li2_forward.1} parent=0 // pred_fallthru
    _
  // Predicated region
  $region14: #{li2_forward.1} parent=0 // pred_check
    _
  $region15: #{li2_forward.1} parent=0 // pred_check_branch
    %19 = sbr.rel (0) target = $region17
  $region16: #{li2_forward.1} parent=0 // pred_region
    _
  $region17: #{li2_forward.1} parent=0 // pred_fallthru
    _
  %v20 = vld [vmem:[%s0] sm:$0xff]
  %v21 = vld [vmem:[%s0 + $0x8] sm:$0xff]
  %v22 = vld [vmem:[%s1] sm:$0xff]
  %v23 = vld [vmem:[%s1 + $0x8] sm:$0xff]
  %v24 = vld [vmem:[%s2] sm:$0xff]
  %v25 = vld [vmem:[%s2 + $0x8] sm:$0xff]
  %v26 = vld [vmem:[%s3] sm:$0xff]
  %v27 = vsub.f32 %v20, %v22
  %v28 = vsub.f32 %v21, %v23
  %30 = vset.pattern.permute.xlu0 0
  %31 = vperm.xlu0 %30, %v26
  %v32 = vpop.permute.xlu0 %31
  %v34 = vmul.f32 %v32, %v27
  %v35 = vmul.f32 %v32, %v28
  %v36 = vadd.f32 %v22, %v34
  %v37 = vadd.f32 %v23, %v35
  %v38 = vsub.f32 %v22, %v24
  %v39 = vsub.f32 %v23, %v25
  %40 = vset.pattern.permute.xlu0 1
  %41 = vperm.xlu0 %40, %v26
  %v42 = vpop.permute.xlu0 %41
  %v44 = vmul.f32 %v42, %v38
  %v45 = vmul.f32 %v42, %v39
  %v46 = vadd.f32 %v24, %v44
  %v47 = vadd.f32 %v25, %v45
  %48 = vset.pattern.permute.xlu0 3
  %49 = vperm.xlu0 %48, %v26
  %v50 = vpop.permute.xlu0 %49
  %v52 = vmul.f32 %v36, %v50
  %v53 = vmul.f32 %v37, %v50
  %54 = vset.pattern.permute.xlu0 4
  %55 = vperm.xlu0 %54, %v26
  %v56 = vpop.permute.xlu0 %55
  %v58 = vmul.f32 %v46, %v56
  %v59 = vmul.f32 %v47, %v56
  %v60 = vadd.f32 %v52, %v58
  %v61 = vadd.f32 %v53, %v59
  %62 = vset.pattern.permute.xlu0 2
  %63 = vperm.xlu0 %62, %v26
  %v64 = vpop.permute.xlu0 %63
  %v66 = vadd.f32 %v60, %v64
  %v67 = vadd.f32 %v61, %v64
  %v68 = vmax.f32 %v66, 0.0
  %v69 = vmax.f32 %v67, 0.0
  %v70 = vmin.f32 %v68, 1.0
  %v71 = vmin.f32 %v69, 1.0
  %72 = vst [vmem:[%s4] sm:$0xff] %v70
  %73 = vst [vmem:[%s4 + $0x8] sm:$0xff] %v71
  %74 = vst [vmem:[%s5] sm:$0xff] %v36
  %75 = vst [vmem:[%s5 + $0x8] sm:$0xff] %v37
  %76 = vst [vmem:[%s6] sm:$0xff] %v46
  %77 = vst [vmem:[%s6 + $0x8] sm:$0xff] %v47
  // Predicated region
  $region18: #{li2_forward.1} parent=0 // pred_check
    _
  $region19: #{li2_forward.1} parent=0 // pred_check_branch
    %79 = sbr.rel (0) target = $region21
  $region20: #{li2_forward.1} parent=0 // pred_region
    _
  $region21: #{li2_forward.1} parent=0 // pred_fallthru
    _
  // Predicated region
  $region22: #{li2_forward.1} parent=0 // pred_check
    _
  $region23: #{li2_forward.1} parent=0 // pred_check_branch
    %81 = sbr.rel (0) target = $region25
  $region24: #{li2_forward.1} parent=0 // pred_region
    _
  $region25: #{li2_forward.1} parent=0 // pred_fallthru
    _
  // Predicated region
  $region26: #{li2_forward.1} parent=0 // pred_check
    _
  $region27: #{li2_forward.1} parent=0 // pred_check_branch
    %83 = sbr.rel (0) target = $region29
  $region28: #{li2_forward.1} parent=0 // pred_region
    _
  $region29: #{li2_forward.1} parent=0 // pred_fallthru
    _
  // Predicated region
  $region30: #{li2_forward.1} parent=0 // pred_check
    _
  $region31: #{li2_forward.1} parent=0 // pred_check_branch
    %85 = sbr.rel (0) target = $region33
  $region32: #{li2_forward.1} parent=0 // pred_region
    _
  $region33: #{li2_forward.1} parent=0 // pred_fallthru
    _
  // Predicated region
  $region34: #{li2_forward.1} parent=0 // pred_check
    _
  $region35: #{li2_forward.1} parent=0 // pred_check_branch
    %87 = sbr.rel (0) target = $region37
  $region36: #{li2_forward.1} parent=0 // pred_region
    _
  $region37: #{li2_forward.1} parent=0 // pred_fallthru
    _
  // Predicated region
  $region38: #{li2_forward.1} parent=0 // pred_check
    _
  $region39: #{li2_forward.1} parent=0 // pred_check_branch
    %89 = sbr.rel (0) target = $region41
  $region40: #{li2_forward.1} parent=0 // pred_region
    _
  $region41: #{li2_forward.1} parent=0 // pred_fallthru
    _

</llo_original>
